<compile_context>
chip_gen: v6e
topology: v6e:2x2x1
jax: 0.10.0
libtpu: 0.0.40
codegen_flags: <defaults>
</compile_context>

<pallas_src>
import functools

import jax
import jax.numpy as jnp
from jax.experimental import pallas as pl
from jax.experimental.pallas import tpu as pltpu


def _round_up(x, n):
    return ((x + n - 1) // n) * n


def _ffn_kernel(x_ref, w1_ref, b1_ref, w2_ref, b2_ref, o_ref, *, act_before):
    """Fused FFN tile: (optional SiLU) -> x@W1+b1 -> SiLU -> @W2+b2."""
    x = x_ref[...]
    if act_before:
        xf = x.astype(jnp.float32)
        # SiLU in f32 (sigmoid uses the EUP slot), cast back so the MXU gets
        # the operand in its native (possibly bf16) dtype.
        x = (xf * jax.nn.sigmoid(xf)).astype(x_ref.dtype)

    # First matmul: operands in native dtype, f32 accumulation.
    h = jnp.dot(x, w1_ref[...], preferred_element_type=jnp.float32)
    h = h + b1_ref[...].astype(jnp.float32)
    h = h * jax.nn.sigmoid(h)            # SiLU on the f32 accumulator
    h = h.astype(w2_ref.dtype)           # back to operand dtype for the 2nd MXU pass

    y = jnp.dot(h, w2_ref[...], preferred_element_type=jnp.float32)
    y = y + b2_ref[...].astype(jnp.float32)
    o_ref[...] = y.astype(o_ref.dtype)


def _vmem_bytes(tile_m, in_f, hid, out_f, act_bytes, w_bytes):
    """Conservative VMEM estimate for one buffer plan."""
    weights = 2 * (in_f * hid + hid * out_f + hid + out_f) * w_bytes  # resident W/b (double-buffered)
    acts = 2 * tile_m * (in_f + out_f) * act_bytes                    # pipelined x / out tiles
    inter = tile_m * hid * 4                                          # f32 hidden intermediate
    return weights + acts + inter


def feed_forward_network(x, w1, b1, w2, b2, *, act_before=True, tile_m=None):
    """Pallas FFN forward.

    Args:
      x:  [..., in_features]
      w1: [in_features, hidden]   (transposed vs. PyTorch's [hidden, in])
      b1: [hidden]
      w2: [hidden, out_features]
      b2: [out_features]
    Returns:
      [..., out_features], same dtype as x.
    """
    orig_shape = x.shape
    in_features = orig_shape[-1]
    hidden = w1.shape[1]
    out_features = w2.shape[1]

    # ---- Lane-dense feature dims: pad hidden/out to multiples of 128 so the
    # hidden intermediate and output use full, unmasked vector stores.  Only
    # the small, reusable weights/biases are padded — never the activations.
    hid_p = _round_up(hidden, 128)
    out_p = _round_up(out_features, 128)
    if hid_p != hidden:
        w1 = jnp.pad(w1, ((0, 0), (0, hid_p - hidden)))
        b1 = jnp.pad(b1, ((0, hid_p - hidden),))
        w2 = jnp.pad(w2, ((0, hid_p - hidden), (0, 0)))
    if out_p != out_features:
        w2 = jnp.pad(w2, ((0, 0), (0, out_p - out_features)))
        b2 = jnp.pad(b2, ((0, out_p - out_features),))

    x2d = x.reshape(-1, in_features)
    m = x2d.shape[0]

    act_bytes = jnp.dtype(x.dtype).itemsize
    w_bytes = jnp.dtype(w1.dtype).itemsize

    # ---- Row tile: as large as possible (feeds the MXU, amortizes grid-step
    # overhead) within a VMEM budget that is safe on v7x (64 MiB) too.
    VMEM_BUDGET = 40 * 1024 * 1024
    if tile_m is None:
        if m < 8:
            tile_m = m                                 # single full row block
        else:
            tile_m = min((m // 8) * 8, 512)            # multiple of 8, <= m
            while tile_m > 8 and _vmem_bytes(tile_m, in_features, hid_p, out_p,
                                             act_bytes, w_bytes) > VMEM_BUDGET:
                tile_m = max(8, ((tile_m // 2) // 8) * 8)
    # TODO(synk): if the resident weights alone exceed the VMEM budget (very
    # large hidden), add an inner "arbitrary" grid axis over hidden with an
    # f32 VMEM accumulator instead of holding W1/W2 whole.

    grid = (pl.cdiv(m, tile_m),)  # trailing partial row block is masked by Pallas

    b1_2d = b1.reshape(1, hid_p)
    b2_2d = b2.reshape(1, out_p)

    needed = _vmem_bytes(tile_m, in_features, hid_p, out_p, act_bytes, w_bytes)
    vmem_limit = int(min(max(needed * 3 // 2 + (4 << 20), 32 << 20), 48 << 20))

    out = pl.pallas_call(
        functools.partial(_ffn_kernel, act_before=act_before),
        out_shape=jax.ShapeDtypeStruct((m, out_p), x.dtype),
        grid_spec=pltpu.PrefetchScalarGridSpec(
            num_scalar_prefetch=0,
            grid=grid,
            in_specs=[
                pl.BlockSpec((tile_m, in_features), lambda i: (i, 0)),  # x row tile
                pl.BlockSpec((in_features, hid_p), lambda i: (0, 0)),   # W1 (resident)
                pl.BlockSpec((1, hid_p), lambda i: (0, 0)),             # b1
                pl.BlockSpec((hid_p, out_p), lambda i: (0, 0)),         # W2 (resident)
                pl.BlockSpec((1, out_p), lambda i: (0, 0)),             # b2
            ],
            out_specs=pl.BlockSpec((tile_m, out_p), lambda i: (i, 0)),
        ),
        compiler_params=pltpu.CompilerParams(
            dimension_semantics=("parallel",),
            vmem_limit_bytes=vmem_limit),
    )(x2d, w1, b1_2d, w2, b2_2d)

    if out_p != out_features:
        out = out[:, :out_features]
    return out.reshape(*orig_shape[:-1], out_features)


def _init_params(key, in_features, hidden, out_features, dtype=jnp.float32):
    """Deterministic param init (PyTorch-Linear-style uniform bounds)."""
    k1, k2, k3, k4 = jax.random.split(key, 4)
    bound1 = 1.0 / (in_features ** 0.5)
    bound2 = 1.0 / (hidden ** 0.5)
    w1 = jax.random.uniform(k1, (in_features, hidden), dtype, -bound1, bound1)
    b1 = jax.random.uniform(k2, (hidden,), dtype, -bound1, bound1)
    w2 = jax.random.uniform(k3, (hidden, out_features), dtype, -bound2, bound2)
    b2 = jax.random.uniform(k4, (out_features,), dtype, -bound2, bound2)
    return w1, b1, w2, b2


def _ref(x, w1, b1, w2, b2, act_before):
    h = x
    if act_before:
        h = h * jax.nn.sigmoid(h)
    h = h @ w1 + b1
    h = h * jax.nn.sigmoid(h)
    return h @ w2 + b2


if __name__ == "__main__":
    key = jax.random.PRNGKey(0)
    kx, kx2, kp = jax.random.split(key, 3)

    # Small shapes consistent with the module's forward: x = [batch, seq, in_features]
    batch, seq = 2, 8
    in_features, hidden, out_features = 32, 64, 32

    w1, b1, w2, b2 = _init_params(kp, in_features, hidden, out_features)

    # Check 1: 3-D input, act_before=True (module default).
    x = jax.random.normal(kx, (batch, seq, in_features), dtype=jnp.float32)
    y = feed_forward_network(x, w1, b1, w2, b2, act_before=True)
    y = jax.block_until_ready(y)
    y_ref = _ref(x, w1, b1, w2, b2, act_before=True)
    assert y.shape == (batch, seq, out_features)
    assert jnp.allclose(y, y_ref, atol=2e-5, rtol=2e-5)

    # Check 2: 2-D input whose row count does not divide the tile (exercises the
    # partial trailing block), act_before=False.
    x2 = jax.random.normal(kx2, (37, in_features), dtype=jnp.float32)
    y2 = feed_forward_network(x2, w1, b1, w2, b2, act_before=False)
    y2 = jax.block_until_ready(y2)
    y2_ref = _ref(x2, w1, b1, w2, b2, act_before=False)
    assert y2.shape == (37, out_features)
    assert jnp.allclose(y2, y2_ref, atol=2e-5, rtol=2e-5)

    print("KERNEL_OK")
</pallas_src>

<mosaic_0001>
module attributes {stable_mosaic.version = 11 : i64} {
  func.func @_ffn_kernel(%arg0: i32, %arg1: memref<16x32xf32, #tpu.memory_space<vmem>>, %arg2: memref<32x128xf32, #tpu.memory_space<vmem>>, %arg3: memref<1x128xf32, #tpu.memory_space<vmem>>, %arg4: memref<128x128xf32, #tpu.memory_space<vmem>>, %arg5: memref<1x128xf32, #tpu.memory_space<vmem>>, %arg6: memref<16x128xf32, #tpu.memory_space<vmem>>) attributes {dimension_semantics = [#tpu.dimension_semantics<parallel>], iteration_bounds = array<i64: 1>, scalar_prefetch = 0 : i64, scratch_operands = 0 : i64, tpu.core_type = #tpu.core_type<tc>, window_params = [{transform_indices = @transform_0, window_bounds = array<i64: 16, 32>}, {pipeline_mode = #tpu.pipeline_mode<synchronous>, transform_indices = @transform_1, window_bounds = array<i64: 32, 128>}, {pipeline_mode = #tpu.pipeline_mode<synchronous>, transform_indices = @transform_2, window_bounds = array<i64: 1, 128>}, {pipeline_mode = #tpu.pipeline_mode<synchronous>, transform_indices = @transform_3, window_bounds = array<i64: 128, 128>}, {pipeline_mode = #tpu.pipeline_mode<synchronous>, transform_indices = @transform_4, window_bounds = array<i64: 1, 128>}, {transform_indices = @transform_5, window_bounds = array<i64: 16, 128>}]} {
    %c0 = arith.constant 0 : index
    %c0_0 = arith.constant 0 : index
    %0 = vector.load %arg1[%c0, %c0_0] : memref<16x32xf32, #tpu.memory_space<vmem>>, vector<16x32xf32>
    %1 = arith.negf %0 : vector<16x32xf32>
    %2 = math.exp %1 : vector<16x32xf32>
    %cst = arith.constant 1.000000e+00 : f32
    %3 = vector.broadcast %cst : f32 to vector<16x32xf32>
    %4 = arith.addf %3, %2 : vector<16x32xf32>
    %5 = arith.divf %3, %4 : vector<16x32xf32>
    %6 = arith.mulf %0, %5 : vector<16x32xf32>
    %c0_1 = arith.constant 0 : index
    %c0_2 = arith.constant 0 : index
    %7 = vector.load %arg2[%c0_1, %c0_2] : memref<32x128xf32, #tpu.memory_space<vmem>>, vector<32x128xf32>
    %cst_3 = arith.constant dense<0.000000e+00> : vector<16x128xf32>
    %8 = tpu.matmul %6, %7, %cst_3 {dimension_numbers = #tpu.dot_dimension_numbers<[1], [0], [0], [1], [0, 0, 1, 1], [], []>} : vector<16x32xf32>, vector<32x128xf32>, vector<16x128xf32> -> vector<16x128xf32>
    %c0_4 = arith.constant 0 : index
    %c0_5 = arith.constant 0 : index
    %9 = vector.load %arg3[%c0_4, %c0_5] : memref<1x128xf32, #tpu.memory_space<vmem>>, vector<1x128xf32>
    %10 = vector.broadcast %9 : vector<1x128xf32> to vector<16x128xf32>
    %11 = arith.addf %8, %10 : vector<16x128xf32>
    %12 = arith.negf %11 : vector<16x128xf32>
    %13 = math.exp %12 : vector<16x128xf32>
    %cst_6 = arith.constant 1.000000e+00 : f32
    %14 = vector.broadcast %cst_6 : f32 to vector<16x128xf32>
    %15 = arith.addf %14, %13 : vector<16x128xf32>
    %16 = arith.divf %14, %15 : vector<16x128xf32>
    %17 = arith.mulf %11, %16 : vector<16x128xf32>
    %c0_7 = arith.constant 0 : index
    %c0_8 = arith.constant 0 : index
    %18 = vector.load %arg4[%c0_7, %c0_8] : memref<128x128xf32, #tpu.memory_space<vmem>>, vector<128x128xf32>
    %cst_9 = arith.constant dense<0.000000e+00> : vector<16x128xf32>
    %19 = tpu.matmul %17, %18, %cst_9 {dimension_numbers = #tpu.dot_dimension_numbers<[1], [0], [0], [1], [0, 0, 1, 1], [], []>} : vector<16x128xf32>, vector<128x128xf32>, vector<16x128xf32> -> vector<16x128xf32>
    %c0_10 = arith.constant 0 : index
    %c0_11 = arith.constant 0 : index
    %20 = vector.load %arg5[%c0_10, %c0_11] : memref<1x128xf32, #tpu.memory_space<vmem>>, vector<1x128xf32>
    %21 = vector.broadcast %20 : vector<1x128xf32> to vector<16x128xf32>
    %22 = arith.addf %19, %21 : vector<16x128xf32>
    %c0_12 = arith.constant 0 : index
    %c0_13 = arith.constant 0 : index
    %23 = vector.load %arg6[%c0_12, %c0_13] : memref<16x128xf32, #tpu.memory_space<vmem>>, vector<16x128xf32>
    tpu.vector_store %arg6[%c0_12, %c0_13], %22 {strides = array<i32>} : memref<16x128xf32, #tpu.memory_space<vmem>>, vector<16x128xf32>,
    return
  }
  func.func @transform_0(%arg0: i32) -> (i32, i32) {
    %c0_i32 = arith.constant 0 : i32
    %c0_i32_0 = arith.constant 0 : i32
    return %arg0, %c0_i32 : i32, i32
  }
  func.func @transform_1(%arg0: i32) -> (i32, i32) {
    %c0_i32 = arith.constant 0 : i32
    %c0_i32_0 = arith.constant 0 : i32
    %c0_i32_1 = arith.constant 0 : i32
    return %c0_i32, %c0_i32_0 : i32, i32
  }
  func.func @transform_2(%arg0: i32) -> (i32, i32) {
    %c0_i32 = arith.constant 0 : i32
    %c0_i32_0 = arith.constant 0 : i32
    %c0_i32_1 = arith.constant 0 : i32
    return %c0_i32, %c0_i32_0 : i32, i32
  }
  func.func @transform_3(%arg0: i32) -> (i32, i32) {
    %c0_i32 = arith.constant 0 : i32
    %c0_i32_0 = arith.constant 0 : i32
    %c0_i32_1 = arith.constant 0 : i32
    return %c0_i32, %c0_i32_0 : i32, i32
  }
  func.func @transform_4(%arg0: i32) -> (i32, i32) {
    %c0_i32 = arith.constant 0 : i32
    %c0_i32_0 = arith.constant 0 : i32
    %c0_i32_1 = arith.constant 0 : i32
    return %c0_i32, %c0_i32_0 : i32, i32
  }
  func.func @transform_5(%arg0: i32) -> (i32, i32) {
    %c0_i32 = arith.constant 0 : i32
    %c0_i32_0 = arith.constant 0 : i32
    return %arg0, %c0_i32 : i32, i32
  }
}

</mosaic_0001>

<llo_original>
// kernel: tpu_custom_call.1
$region0: #{tpu_custom_call.1}
  #allocation0 [shape = 'u32[]', space=smem, size = 0x4, offset = 0x4, fixed_abs, tag = 'smem constant byte address 0x4 - core index']
  #allocation1 [shape = 'u32[144,128]{1,0:T(1,128)}', space=vmem, size = 0x12000, scoped, tag = 'internal scratch']
  %s0 = inlined_call_operand.hbm [shape: f32[16,32], index: 0, kind: input, shape index: {}]
  %s1 = inlined_call_operand.hbm [shape: f32[32,128], index: 1, kind: input, shape index: {}]
  %s2 = inlined_call_operand.vmem [shape: f32[1,128], index: 2, kind: input, shape index: {}]
  %s3 = inlined_call_operand.hbm [shape: f32[128,128], index: 3, kind: input, shape index: {}]
  %s4 = inlined_call_operand.vmem [shape: f32[1,128], index: 4, kind: input, shape index: {}]
  %s5 = inlined_call_operand.hbm [shape: f32[16,128], index: 5, kind: output, shape index: {}]
  %s6 = sld [smem:[#allocation0]]
  $region42: #{tpu_custom_call.1} parent=0
    _
  %s8 = ssub.s32 1, %s6
  %s9 = scalar_select 0, %s8, %s6
  $region1: #{tpu_custom_call.1} parent=0
    #allocation2 [shape = 'u8[8192]{0}', space=vmem, size = 0x2000, scoped, tag = 'input window, operand 0, single buffered']
    #allocation3 [shape = 's32[1]{0}', space=sflag, size = 0x4, scoped, tag = 'scoped memory for tpu_custom_call.1']
    #allocation4 [shape = 's32[1]{0}', space=sflag, size = 0x4, scoped, tag = 'scoped memory for tpu_custom_call.1']
    #allocation5 [shape = 'u8[16384]{0}', space=vmem, size = 0x4000, scoped, tag = 'input window, operand 1, single buffered']
    #allocation6 [shape = 's32[1]{0}', space=sflag, size = 0x4, scoped, tag = 'scoped memory for tpu_custom_call.1']
    #allocation7 [shape = 'u8[65536]{0}', space=vmem, size = 0x10000, scoped, tag = 'input window, operand 3, single buffered']
    #allocation8 [shape = 'u8[8192]{0}', space=vmem, size = 0x2000, scoped, tag = 'output window, operand 0, single buffered']
    %10 = vsyncpa [#allocation3], 0
    %11 = vsyncpa [#allocation6], 0
    %12 = vsyncpa [#allocation4], 0
    // Predicated region
    $region2: #{tpu_custom_call.1} parent=1 // pred_check
      _
    $region3: #{tpu_custom_call.1} parent=1 // pred_check_branch
      %14 = sbr.rel (0) target = $region5
    $region4: #{tpu_custom_call.1} parent=1 // pred_region
      %s16 = ssub.s32 256, 256
      %17 = vsyncadd [#allocation3], %s16
      %s18 = sshll.u32 [#allocation2], 4
      %s19 = int_to_ptr.vmem [resolvable:$true] %s18
      %24 = dma.hbm_to_vmem [thread:$0]  %s0, 256, %s19, [#allocation3], 128, 128, 8
    $region5: #{tpu_custom_call.1} parent=1 // pred_fallthru
      _
    // Predicated region
    $region6: #{tpu_custom_call.1} parent=1 // pred_check
      _
    $region7: #{tpu_custom_call.1} parent=1 // pred_check_branch
      %26 = sbr.rel (0) target = $region9
    $region8: #{tpu_custom_call.1} parent=1 // pred_region
      %s28 = ssub.s32 512, 512
      %29 = vsyncadd [#allocation6], %s28
      %s30 = sshll.u32 [#allocation5], 4
      %s31 = int_to_ptr.vmem [resolvable:$true] %s30
      %36 = dma.hbm_to_vmem [thread:$0]  %s1, 512, %s31, [#allocation6], 128, 128, 8
    $region9: #{tpu_custom_call.1} parent=1 // pred_fallthru
      _
    // Predicated region
    $region10: #{tpu_custom_call.1} parent=1 // pred_check
      _
    $region11: #{tpu_custom_call.1} parent=1 // pred_check_branch
      %38 = sbr.rel (0) target = $region13
    $region12: #{tpu_custom_call.1} parent=1 // pred_region
      _
    $region13: #{tpu_custom_call.1} parent=1 // pred_fallthru
      _
    // Predicated region
    $region14: #{tpu_custom_call.1} parent=1 // pred_check
      _
    $region15: #{tpu_custom_call.1} parent=1 // pred_check_branch
      %40 = sbr.rel (0) target = $region17
    $region16: #{tpu_custom_call.1} parent=1 // pred_region
      %s42 = ssub.s32 2048, 2048
      %43 = vsyncadd [#allocation6], %s42
      %s44 = sshll.u32 [#allocation7], 4
      %s45 = int_to_ptr.vmem [resolvable:$true] %s44
      %50 = dma.hbm_to_vmem [thread:$0]  %s3, 2048, %s45, [#allocation6], 128, 128, 8
    $region17: #{tpu_custom_call.1} parent=1 // pred_fallthru
      _
    // Predicated region
    $region18: #{tpu_custom_call.1} parent=1 // pred_check
      _
    $region19: #{tpu_custom_call.1} parent=1 // pred_check_branch
      %52 = sbr.rel (0) target = $region21
    $region20: #{tpu_custom_call.1} parent=1 // pred_region
      _
    $region21: #{tpu_custom_call.1} parent=1 // pred_fallthru
      _
    // Predicated region
    $region22: #{tpu_custom_call.1} parent=1 // pred_check
      _
    $region23: #{tpu_custom_call.1} parent=1 // pred_check_branch
      %54 = sbr.rel (0) target = $region25
    $region24: #{tpu_custom_call.1} parent=1 // pred_region
      %55 = dma.done [#allocation3], 256
    $region25: #{tpu_custom_call.1} parent=1 // pred_fallthru
      _
    // Predicated region
    $region26: #{tpu_custom_call.1} parent=1 // pred_check
      _
    $region27: #{tpu_custom_call.1} parent=1 // pred_check_branch
      %57 = sbr.rel (0) target = $region29
    $region28: #{tpu_custom_call.1} parent=1 // pred_region
      %58 = dma.done [#allocation6], 512
    $region29: #{tpu_custom_call.1} parent=1 // pred_fallthru
      _
    // Predicated region
    $region30: #{tpu_custom_call.1} parent=1 // pred_check
      _
    $region31: #{tpu_custom_call.1} parent=1 // pred_check_branch
      %60 = sbr.rel (0) target = $region33
    $region32: #{tpu_custom_call.1} parent=1 // pred_region
      %61 = dma.done [#allocation6], 2048
    $region33: #{tpu_custom_call.1} parent=1 // pred_fallthru
      _
    %v62 = vld [vmem:[#allocation2] sm:$0xff]
    %v63 = vld [vmem:[#allocation2 + $0x8] sm:$0xff]
    %v64 = vxor.u32 %v62, 2147483648
    %v65 = vxor.u32 %v63, 2147483648
    %v66 = vmul.f32 %v64, 1.442695
    %v67 = vpow.pop %v66
    %v68 = vmul.f32 %v65, 1.442695
    %v69 = vpow.pop %v68
    %v70 = vadd.f32 %v67, 1.0
    %v71 = vadd.f32 %v69, 1.0
    %v72 = vrcp.pop %v70
    %v73 = vmul.f32 1.0, %v72
    %v74 = vrcp.pop %v71
    %v75 = vmul.f32 1.0, %v74
    %v76 = vmul.f32 %v62, %v73
    %v77 = vmul.f32 %v63, %v75
    %v78 = vld [vmem:[#allocation5] sm:$0xff]
    %v79 = vld [vmem:[#allocation5 + $0x8] sm:$0xff]
    %v80 = vld [vmem:[#allocation5 + $0x10] sm:$0xff]
    %v81 = vld [vmem:[#allocation5 + $0x18] sm:$0xff]
    %v82 = vld [vmem:[%s2] sm:$0x1]
    %v84 = vlaneseq
    %v85 = vshrl.u32 %v84, 7
    %v86 = vsub.s32 0, %v85
    %v87 = vrot.slane %v82, %v86
    %vm89 = vcmask 261120
    %v91 = vsel %vm89, %v76, 0
    %v94 = vsel %vm89, %v77, 0
    %96 = vmatprep.subr.mxu0 0.0
    %97 = vmatpush1.msra.mxu0 0.0
    %98 = vmatprep.subr.mxu0 0.0
    %99 = vmatpush1.msra.mxu0 0.0
    %100 = vmatprep.subr.mxu0 0.0
    %101 = vmatpush1.msra.mxu0 0.0
    %102 = vmatprep.subr.mxu0 0.0
    %103 = vmatpush1.msra.mxu0 0.0
    %104 = vmatprep.subr.mxu0 0.0
    %105 = vmatpush1.msra.mxu0 0.0
    %106 = vmatprep.subr.mxu0 0.0
    %107 = vmatpush1.msra.mxu0 0.0
    %108 = vmatprep.subr.mxu0 0.0
    %109 = vmatpush1.msra.mxu0 0.0
    %110 = vmatprep.subr.mxu0 0.0
    %111 = vmatpush1.msra.mxu0 0.0
    %112 = vmatprep.subr.mxu0 0.0
    %113 = vmatpush1.msra.mxu0 0.0
    %114 = vmatprep.subr.mxu0 0.0
    %115 = vmatpush1.msra.mxu0 0.0
    %116 = vmatprep.subr.mxu0 0.0
    %117 = vmatpush1.msra.mxu0 0.0
    %118 = vmatprep.subr.mxu0 0.0
    %119 = vmatpush1.msra.mxu0 0.0
    %120 = vmatprep.subr.mxu0 0.0
    %121 = vmatpush1.msra.mxu0 %v81
    %122 = vmatprep.subr.mxu0 0.0
    %123 = vmatpush1.msra.mxu0 %v80
    %124 = vmatprep.subr.mxu0 0.0
    %125 = vmatpush1.msra.mxu0 %v79
    %126 = vmatprep.subr.mxu0 0.0
    %127 = vmatpush1.msra.mxu0 %v78
    %128 = vmatprep.subr.mxu0 0.0
    %129 = vmatpush2.msra.mxu0 0.0
    %130 = vmatprep.subr.mxu0 0.0
    %131 = vmatpush2.msra.mxu0 0.0
    %132 = vmatprep.subr.mxu0 0.0
    %133 = vmatpush2.msra.mxu0 0.0
    %134 = vmatprep.subr.mxu0 0.0
    %135 = vmatpush2.msra.mxu0 0.0
    %136 = vmatprep.subr.mxu0 0.0
    %137 = vmatpush2.msra.mxu0 0.0
    %138 = vmatprep.subr.mxu0 0.0
    %139 = vmatpush2.msra.mxu0 0.0
    %140 = vmatprep.subr.mxu0 0.0
    %141 = vmatpush2.msra.mxu0 0.0
    %142 = vmatprep.subr.mxu0 0.0
    %143 = vmatpush2.msra.mxu0 0.0
    %144 = vmatprep.subr.mxu0 0.0
    %145 = vmatpush2.msra.mxu0 0.0
    %146 = vmatprep.subr.mxu0 0.0
    %147 = vmatpush2.msra.mxu0 0.0
    %148 = vmatprep.subr.mxu0 0.0
    %149 = vmatpush2.msra.mxu0 0.0
    %150 = vmatprep.subr.mxu0 0.0
    %151 = vmatpush2.msra.mxu0 0.0
    %152 = vmatprep.subr.mxu0 0.0
    %153 = vmatpush2.msra.mxu0 0.0
    %154 = vmatprep.subr.mxu0 0.0
    %155 = vmatpush2.msra.mxu0 0.0
    %156 = vmatprep.subr.mxu0 0.0
    %157 = vmatpush2.msra.mxu0 0.0
    %158 = vmatprep.subr.mxu0 0.0
    %159 = vmatpush2.msra.mxu0 0.0
    %160 = vmatprep.mubr.f32.mxu0 0.0
    %161 = vmatmul.mubr.f32.gmra.mxu0 %v91
    %v162 = vpop.f32.mrf.mxu0
    %v163 = vadd.f32 %v87, %v162
    %v164 = vpop.f32.mrf.mxu0
    %165 = vmatprep.mubr.f32.mxu0 0.0
    %166 = vmatmul.mubr.f32.gmra.mxu0 %v94
    %v167 = vpop.f32.mrf.mxu0
    %v168 = vadd.f32 %v87, %v167
    %v169 = vpop.f32.mrf.mxu0
    %170 = vdwg.mxu0
    %v171 = vxor.u32 %v163, 2147483648
    %v172 = vxor.u32 %v168, 2147483648
    %v173 = vmul.f32 %v171, 1.442695
    %v174 = vpow.pop %v173
    %v175 = vmul.f32 %v172, 1.442695
    %v176 = vpow.pop %v175
    %v177 = vadd.f32 %v174, 1.0
    %v178 = vadd.f32 %v176, 1.0
    %v179 = vrcp.pop %v177
    %v180 = vmul.f32 1.0, %v179
    %v181 = vrcp.pop %v178
    %v182 = vmul.f32 1.0, %v181
    %v183 = vmul.f32 %v163, %v180
    %v184 = vmul.f32 %v168, %v182
    %v185 = vld [vmem:[#allocation7] sm:$0xff]
    %v186 = vld [vmem:[#allocation7 + $0x8] sm:$0xff]
    %v187 = vld [vmem:[#allocation7 + $0x10] sm:$0xff]
    %v188 = vld [vmem:[#allocation7 + $0x18] sm:$0xff]
    %v189 = vld [vmem:[#allocation7 + $0x20] sm:$0xff]
    %v190 = vld [vmem:[#allocation7 + $0x28] sm:$0xff]
    %v191 = vld [vmem:[#allocation7 + $0x30] sm:$0xff]
    %v192 = vld [vmem:[#allocation7 + $0x38] sm:$0xff]
    %v193 = vld [vmem:[#allocation7 + $0x40] sm:$0xff]
    %v194 = vld [vmem:[#allocation7 + $0x48] sm:$0xff]
    %v195 = vld [vmem:[#allocation7 + $0x50] sm:$0xff]
    %v196 = vld [vmem:[#allocation7 + $0x58] sm:$0xff]
    %v197 = vld [vmem:[#allocation7 + $0x60] sm:$0xff]
    %v198 = vld [vmem:[#allocation7 + $0x68] sm:$0xff]
    %v199 = vld [vmem:[#allocation7 + $0x70] sm:$0xff]
    %v200 = vld [vmem:[#allocation7 + $0x78] sm:$0xff]
    %v201 = vld [vmem:[%s4] sm:$0x1]
    %v203 = vlaneseq
    %v204 = vshrl.u32 %v203, 7
    %v205 = vsub.s32 0, %v204
    %v206 = vrot.slane %v201, %v205
    %208 = vmatprep.subr.mxu0 0.0
    %209 = vmatpush1.msra.mxu0 %v200
    %210 = vmatprep.subr.mxu0 0.0
    %211 = vmatpush1.msra.mxu0 %v199
    %212 = vmatprep.subr.mxu0 0.0
    %213 = vmatpush1.msra.mxu0 %v198
    %214 = vmatprep.subr.mxu0 0.0
    %215 = vmatpush1.msra.mxu0 %v197
    %216 = vmatprep.subr.mxu0 0.0
    %217 = vmatpush1.msra.mxu0 %v196
    %218 = vmatprep.subr.mxu0 0.0
    %219 = vmatpush1.msra.mxu0 %v195
    %220 = vmatprep.subr.mxu0 0.0
    %221 = vmatpush1.msra.mxu0 %v194
    %222 = vmatprep.subr.mxu0 0.0
    %223 = vmatpush1.msra.mxu0 %v193
    %224 = vmatprep.subr.mxu0 0.0
    %225 = vmatpush1.msra.mxu0 %v192
    %226 = vmatprep.subr.mxu0 0.0
    %227 = vmatpush1.msra.mxu0 %v191
    %228 = vmatprep.subr.mxu0 0.0
    %229 = vmatpush1.msra.mxu0 %v190
    %230 = vmatprep.subr.mxu0 0.0
    %231 = vmatpush1.msra.mxu0 %v189
    %232 = vmatprep.subr.mxu0 0.0
    %233 = vmatpush1.msra.mxu0 %v188
    %234 = vmatprep.subr.mxu0 0.0
    %235 = vmatpush1.msra.mxu0 %v187
    %236 = vmatprep.subr.mxu0 0.0
    %237 = vmatpush1.msra.mxu0 %v186
    %238 = vmatprep.subr.mxu0 0.0
    %239 = vmatpush1.msra.mxu0 %v185
    %240 = vmatprep.subr.mxu0 0.0
    %241 = vmatpush2.msra.mxu0 0.0
    %242 = vmatprep.subr.mxu0 0.0
    %243 = vmatpush2.msra.mxu0 0.0
    %244 = vmatprep.subr.mxu0 0.0
    %245 = vmatpush2.msra.mxu0 0.0
    %246 = vmatprep.subr.mxu0 0.0
    %247 = vmatpush2.msra.mxu0 0.0
    %248 = vmatprep.subr.mxu0 0.0
    %249 = vmatpush2.msra.mxu0 0.0
    %250 = vmatprep.subr.mxu0 0.0
    %251 = vmatpush2.msra.mxu0 0.0
    %252 = vmatprep.subr.mxu0 0.0
    %253 = vmatpush2.msra.mxu0 0.0
    %254 = vmatprep.subr.mxu0 0.0
    %255 = vmatpush2.msra.mxu0 0.0
    %256 = vmatprep.subr.mxu0 0.0
    %257 = vmatpush2.msra.mxu0 0.0
    %258 = vmatprep.subr.mxu0 0.0
    %259 = vmatpush2.msra.mxu0 0.0
    %260 = vmatprep.subr.mxu0 0.0
    %261 = vmatpush2.msra.mxu0 0.0
    %262 = vmatprep.subr.mxu0 0.0
    %263 = vmatpush2.msra.mxu0 0.0
    %264 = vmatprep.subr.mxu0 0.0
    %265 = vmatpush2.msra.mxu0 0.0
    %266 = vmatprep.subr.mxu0 0.0
    %267 = vmatpush2.msra.mxu0 0.0
    %268 = vmatprep.subr.mxu0 0.0
    %269 = vmatpush2.msra.mxu0 0.0
    %270 = vmatprep.subr.mxu0 0.0
    %271 = vmatpush2.msra.mxu0 0.0
    %272 = vmatprep.mubr.f32.mxu0 0.0
    %273 = vmatmul.mubr.f32.gmra.mxu0 %v183
    %v274 = vpop.f32.mrf.mxu0
    %v275 = vadd.f32 %v206, %v274
    %v276 = vpop.f32.mrf.mxu0
    %277 = vmatprep.mubr.f32.mxu0 0.0
    %278 = vmatmul.mubr.f32.gmra.mxu0 %v184
    %v279 = vpop.f32.mrf.mxu0
    %v280 = vadd.f32 %v206, %v279
    %v281 = vpop.f32.mrf.mxu0
    %282 = vdwg.mxu0
    %283 = vst [vmem:[#allocation8] sm:$0xff] %v275
    %284 = vst [vmem:[#allocation8 + $0x8] sm:$0xff] %v280
    // Predicated region
    $region34: #{tpu_custom_call.1} parent=1 // pred_check
      _
    $region35: #{tpu_custom_call.1} parent=1 // pred_check_branch
      %286 = sbr.rel (0) target = $region37
    $region36: #{tpu_custom_call.1} parent=1 // pred_region
      %s288 = ssub.s32 256, 256
      %289 = vsyncadd [#allocation4], %s288
      %s290 = sshll.u32 [#allocation8], 4
      %s291 = int_to_ptr.vmem [resolvable:$true] %s290
      %296 = dma.vmem_to_hbm [thread:$0]  %s291, 256, %s5, [#allocation4], 128, 128, 8
    $region37: #{tpu_custom_call.1} parent=1 // pred_fallthru
      _
    // Predicated region
    $region38: #{tpu_custom_call.1} parent=1 // pred_check
      _
    $region39: #{tpu_custom_call.1} parent=1 // pred_check_branch
      %298 = sbr.rel (0) target = $region41
    $region40: #{tpu_custom_call.1} parent=1 // pred_region
      %299 = dma.done [#allocation4], 256
    $region41: #{tpu_custom_call.1} parent=1 // pred_fallthru
      _
    %300 = vsyncpa [#allocation3], 1
    %301 = vsyncpa [#allocation6], 1
    %302 = vsyncpa [#allocation4], 1

</llo_original>
